<compile_context>
chip_gen: v6e
topology: v6e:2x2x1
jax: 0.10.0
libtpu: 0.0.40
codegen_flags: <defaults>
</compile_context>

<pallas_src>
import functools

import jax
import jax.numpy as jnp
from jax.experimental import pallas as pl
from jax.experimental.pallas import tpu as pltpu


def _round_up(v, m):
    return ((v + m - 1) // m) * m


def _choose_tiling(n, target_tile, *, min_split=1024, max_tile=65536):
    """Return (tile_n, steps, n_pad) with steps * tile_n == n_pad >= n.

    All blocks are full (no ragged masking); padding is < 128 columns per step.
    Guarantees >= 2 grid steps when the batch is large enough so both v7x
    TensorCores get work, while keeping tiles big enough to amortize the
    ~0.35 us per-grid-step pipeline overhead.
    """
    n128 = _round_up(max(int(n), 1), 128)
    target = _round_up(min(max(int(target_tile), 128), max_tile), 128)
    if n128 <= target:
        steps = 2 if n128 >= min_split else 1
    else:
        steps = max(2, pl.cdiv(n128, target))
    tile = _round_up(pl.cdiv(n128, steps), 128)
    return tile, steps, steps * tile


def _rs_vmem_limit(tile_n, d, hidden):
    d_pad = _round_up(max(d, 8), 8)          # f32 sublane padding: 11 -> 16
    h_pad = _round_up(max(hidden, 8), 8)
    per_col = 4 * (2 * d_pad                 # double-buffered X.T tile
                   + 2 * 8                   # double-buffered (1, tile) output (8-sublane padded)
                   + 8 * h_pad)              # fc1 intermediate + temporaries headroom
    return int(min(max(per_col * tile_n + (4 << 20), 16 << 20), 56 << 20))


# ----------------------------------------------------------------------------
# 'RS' mode:  sigmoid_eps( fc2( leaky_relu( fc1(X) ) ), epsilon )
#   kernel works feature-major:  h = W1.T @ X.T ;  y = sum_j w2[j] * h[j]
# ----------------------------------------------------------------------------
def _rs_kernel(xT_ref, w1_ref, b1_ref, w2_ref, b2_ref, o_ref, *, epsilon):
    xT = xT_ref[...]                                            # (D, TILE_N), lane-dense
    # fc1 on the MXU: (H, D) @ (D, TILE_N) + (H, 1) -> (H, TILE_N)
    h = jnp.dot(w1_ref[...], xT, preferred_element_type=jnp.float32) + b1_ref[...]
    # LeakyReLU (default negative_slope = 0.01)
    h = jnp.where(h > 0, h, 0.01 * h)
    # fc2 as VPU multiply + sublane reduction (avoids a useless 1xH MXU matmul)
    y = jnp.sum(w2_ref[...] * h, axis=0, keepdims=True) + b2_ref[0]   # (1, TILE_N)
    # sigmoid_eps
    o_ref[...] = jax.nn.sigmoid(y) * (1.0 - epsilon)


def twolayers_nn_rs_from_xT(xT, w1, b1, w2, b2, epsilon, *, target_tile_n=32768):
    """Feature-major entry point. xT: (D, N) f32; returns (N,) f32."""
    d, n = xT.shape
    hdim = w1.shape[1]

    tile_n, steps, n_pad = _choose_tiling(n, target_tile_n)
    if n_pad != n:
        xT = jnp.pad(xT, ((0, 0), (0, n_pad - n)))              # < 128 cols/step of pad

    out = pl.pallas_call(
        functools.partial(_rs_kernel, epsilon=float(epsilon)),
        grid=(steps,),
        out_shape=jax.ShapeDtypeStruct((1, n_pad), jnp.float32),
        in_specs=[
            pl.BlockSpec((d, tile_n), lambda i: (0, i)),        # streamed X.T tile
            pl.BlockSpec((hdim, d), lambda i: (0, 0)),          # resident W1.T
            pl.BlockSpec((hdim, 1), lambda i: (0, 0)),          # resident b1
            pl.BlockSpec((hdim, 1), lambda i: (0, 0)),          # resident w2 column
            pl.BlockSpec(memory_space=pltpu.SMEM),              # b2 scalar
        ],
        out_specs=pl.BlockSpec((1, tile_n), lambda i: (0, i)),  # lane-dense output slab
        compiler_params=pltpu.CompilerParams(
            dimension_semantics=("parallel",),
            vmem_limit_bytes=_rs_vmem_limit(tile_n, d, hdim),
        ),
    )(xT, w1.T, b1.reshape(hdim, 1), w2, b2)
    return out[0, :n]                                           # torch.squeeze of (N, 1)


def twolayers_nn_rs(x, w1, b1, w2, b2, epsilon, *, target_tile_n=32768):
    """x: (N, D) f32; w1: (D, H); b1: (H,); w2: (H, 1); b2: (1,). Returns (N,).

    NOTE: the x.T here is one extra HBM pass (fused with the tiny pad); callers
    that can cache X feature-major should call twolayers_nn_rs_from_xT directly.
    """
    return twolayers_nn_rs_from_xT(x.T, w1, b1, w2, b2, epsilon,
                                   target_tile_n=target_tile_n)


# ----------------------------------------------------------------------------
# 'case1' mode:  y_hat = X[:, 0] * (tanh(theta) + 2) / epsilon
#   scale precomputed in the wrapper; only the first feature column streamed.
#   TODO(synk): in production this trivial slice+scale is best left to XLA.
# ----------------------------------------------------------------------------
def _case1_kernel(scale_ref, x0_ref, o_ref):
    o_ref[...] = x0_ref[...] * scale_ref[0]                     # (1, TILE_N)


def twolayers_nn_case1(x, theta, epsilon, *, target_tile_n=65536):
    """x: (N, D) f32, theta: (1,) f32; returns (N,) f32."""
    n = x.shape[0]
    scale = ((jnp.tanh(theta[0]) + 2.0) / epsilon).reshape(1).astype(jnp.float32)

    tile_n, steps, n_pad = _choose_tiling(n, target_tile_n)
    x0 = x[:, 0][None, :]
    if n_pad != n:
        x0 = jnp.pad(x0, ((0, 0), (0, n_pad - n)))

    vmem_limit = int(min(max(4 * tile_n * (2 * 8 + 2 * 8 + 8) + (2 << 20), 16 << 20), 56 << 20))
    out = pl.pallas_call(
        _case1_kernel,
        grid=(steps,),
        out_shape=jax.ShapeDtypeStruct((1, n_pad), jnp.float32),
        in_specs=[
            pl.BlockSpec(memory_space=pltpu.SMEM),              # precomputed scale scalar
            pl.BlockSpec((1, tile_n), lambda i: (0, i)),        # streamed X[:, 0]
        ],
        out_specs=pl.BlockSpec((1, tile_n), lambda i: (0, i)),
        compiler_params=pltpu.CompilerParams(
            dimension_semantics=("parallel",),
            vmem_limit_bytes=vmem_limit,
        ),
    )(scale, x0)
    return out[0, :n]


# ----------------------------------------------------------------------------
# Pure-JAX references
# ----------------------------------------------------------------------------
def _rs_ref(x, w1, b1, w2, b2, epsilon):
    h = jnp.dot(x, w1, precision=jax.lax.Precision.HIGHEST) + b1
    h = jnp.where(h > 0, h, 0.01 * h)
    y = jnp.squeeze(jnp.dot(h, w2, precision=jax.lax.Precision.HIGHEST) + b2)
    return jax.nn.sigmoid(y) * (1.0 - epsilon)


def _case1_ref(x, theta, epsilon):
    return x[:, 0] * (jnp.tanh(theta[0]) + 2.0) / epsilon


if __name__ == "__main__":
    epsilon = 0.05
    hidden_size = 8
    in_features = 11

    key = jax.random.PRNGKey(0)
    kx0, kx1, kx2, k1, k2, k3, k4 = jax.random.split(key, 7)

    # Deterministic parameter init (shapes match nn.Linear(11, H) / nn.Linear(H, 1))
    bound1 = 1.0 / jnp.sqrt(in_features)
    bound2 = 1.0 / jnp.sqrt(hidden_size)
    w1 = jax.random.uniform(k1, (in_features, hidden_size), jnp.float32, -bound1, bound1)
    b1 = jax.random.uniform(k2, (hidden_size,), jnp.float32, -bound1, bound1)
    w2 = jax.random.uniform(k3, (hidden_size, 1), jnp.float32, -bound2, bound2)
    b2 = jax.random.uniform(k4, (1,), jnp.float32, -bound2, bound2)

    # case1 parameter: theta = atanh(0.5)
    theta = jnp.full((1,), jnp.arctanh(0.5), dtype=jnp.float32)

    # Batches: single tile (8), small multi-step grid (1000 -> 2 x 512),
    # and a larger one exercising the padded multi-step path (20000 -> 2 x 10112).
    for batch, kb in ((8, kx0), (1000, kx1), (20000, kx2)):
        x = jax.random.normal(kb, (batch, in_features), dtype=jnp.float32)

        # --- 'RS' mode ---
        y_rs = twolayers_nn_rs(x, w1, b1, w2, b2, epsilon)
        jax.block_until_ready(y_rs)
        y_rs_ref = _rs_ref(x, w1, b1, w2, b2, epsilon)
        assert y_rs.shape == (batch,)
        assert jnp.allclose(y_rs, y_rs_ref, atol=1e-4, rtol=1e-4), f"RS mismatch (N={batch})"

        # --- 'case1' mode ---
        y_c1 = twolayers_nn_case1(x, theta, epsilon)
        jax.block_until_ready(y_c1)
        y_c1_ref = _case1_ref(x, theta, epsilon)
        assert y_c1.shape == (batch,)
        assert jnp.allclose(y_c1, y_c1_ref, atol=1e-4, rtol=1e-4), f"case1 mismatch (N={batch})"

    print("KERNEL_OK")
</pallas_src>

<mosaic_0001>
module attributes {stable_mosaic.version = 11 : i64} {
  func.func @_rs_kernel(%arg0: i32, %arg1: memref<11x128xf32, #tpu.memory_space<vmem>>, %arg2: memref<8x11xf32, #tpu.memory_space<vmem>>, %arg3: memref<8x1xf32, #tpu.memory_space<vmem>>, %arg4: memref<8x1xf32, #tpu.memory_space<vmem>>, %arg5: memref<1xf32, #tpu.memory_space<smem>>, %arg6: memref<1x128xf32, #tpu.memory_space<vmem>>) attributes {dimension_semantics = [#tpu.dimension_semantics<parallel>], iteration_bounds = array<i64: 1>, scalar_prefetch = 0 : i64, scratch_operands = 0 : i64, tpu.core_type = #tpu.core_type<tc>, window_params = [{transform_indices = @transform_0, window_bounds = array<i64: 11, 128>}, {pipeline_mode = #tpu.pipeline_mode<synchronous>, transform_indices = @transform_1, window_bounds = array<i64: 8, 11>}, {pipeline_mode = #tpu.pipeline_mode<synchronous>, transform_indices = @transform_2, window_bounds = array<i64: 8, 1>}, {pipeline_mode = #tpu.pipeline_mode<synchronous>, transform_indices = @transform_3, window_bounds = array<i64: 8, 1>}, {transform_indices = @transform_4, window_bounds = array<i64: 1>}, {transform_indices = @transform_5, window_bounds = array<i64: 1, 128>}]} {
    %c0 = arith.constant 0 : index
    %c0_0 = arith.constant 0 : index
    %0 = vector.load %arg1[%c0, %c0_0] : memref<11x128xf32, #tpu.memory_space<vmem>>, vector<11x128xf32>
    %c0_1 = arith.constant 0 : index
    %c0_2 = arith.constant 0 : index
    %1 = vector.load %arg2[%c0_1, %c0_2] : memref<8x11xf32, #tpu.memory_space<vmem>>, vector<8x11xf32>
    %cst = arith.constant dense<0.000000e+00> : vector<8x128xf32>
    %2 = tpu.matmul %1, %0, %cst {dimension_numbers = #tpu.dot_dimension_numbers<[1], [0], [0], [1], [0, 0, 1, 1], [], []>} : vector<8x11xf32>, vector<11x128xf32>, vector<8x128xf32> -> vector<8x128xf32>
    %c0_3 = arith.constant 0 : index
    %c0_4 = arith.constant 0 : index
    %3 = vector.load %arg3[%c0_3, %c0_4] : memref<8x1xf32, #tpu.memory_space<vmem>>, vector<8x1xf32>
    %4 = vector.broadcast %3 : vector<8x1xf32> to vector<8x128xf32>
    %5 = arith.addf %2, %4 : vector<8x128xf32>
    %cst_5 = arith.constant 0.000000e+00 : f32
    %6 = vector.broadcast %cst_5 : f32 to vector<8x128xf32>
    %7 = arith.cmpf ogt, %5, %6 : vector<8x128xf32>
    %cst_6 = arith.constant 0.00999999977 : f32
    %8 = vector.broadcast %cst_6 : f32 to vector<8x128xf32>
    %9 = arith.mulf %8, %5 : vector<8x128xf32>
    %10 = arith.select %7, %5, %9 : vector<8x128xi1>, vector<8x128xf32>
    %c0_7 = arith.constant 0 : index
    %c0_8 = arith.constant 0 : index
    %11 = vector.load %arg4[%c0_7, %c0_8] : memref<8x1xf32, #tpu.memory_space<vmem>>, vector<8x1xf32>
    %12 = vector.broadcast %11 : vector<8x1xf32> to vector<8x128xf32>
    %13 = arith.mulf %12, %10 : vector<8x128xf32>
    %cst_9 = arith.constant dense<0.000000e+00> : vector<128xf32>
    %14 = vector.multi_reduction <add>, %13, %cst_9 [0] : vector<8x128xf32> to vector<128xf32>
    %15 = vector.shape_cast %14 : vector<128xf32> to vector<1x128xf32>
    %c0_10 = arith.constant 0 : index
    %16 = memref.load %arg5[%c0_10] : memref<1xf32, #tpu.memory_space<smem>>
    %17 = vector.broadcast %16 : f32 to vector<1x128xf32>
    %18 = arith.addf %15, %17 : vector<1x128xf32>
    %19 = arith.negf %18 : vector<1x128xf32>
    %20 = math.exp %19 : vector<1x128xf32>
    %cst_11 = arith.constant 1.000000e+00 : f32
    %21 = vector.broadcast %cst_11 : f32 to vector<1x128xf32>
    %22 = arith.addf %21, %20 : vector<1x128xf32>
    %23 = arith.divf %21, %22 : vector<1x128xf32>
    %cst_12 = arith.constant 0.949999988 : f32
    %24 = vector.broadcast %cst_12 : f32 to vector<1x128xf32>
    %25 = arith.mulf %23, %24 : vector<1x128xf32>
    %c0_13 = arith.constant 0 : index
    %c0_14 = arith.constant 0 : index
    %26 = vector.load %arg6[%c0_13, %c0_14] : memref<1x128xf32, #tpu.memory_space<vmem>>, vector<1x128xf32>
    tpu.vector_store %arg6[%c0_13, %c0_14], %25 {strides = array<i32>} : memref<1x128xf32, #tpu.memory_space<vmem>>, vector<1x128xf32>,
    return
  }
  func.func @transform_0(%arg0: i32) -> (i32, i32) {
    %c0_i32 = arith.constant 0 : i32
    %c0_i32_0 = arith.constant 0 : i32
    return %c0_i32, %arg0 : i32, i32
  }
  func.func @transform_1(%arg0: i32) -> (i32, i32) {
    %c0_i32 = arith.constant 0 : i32
    %c0_i32_0 = arith.constant 0 : i32
    %c0_i32_1 = arith.constant 0 : i32
    return %c0_i32, %c0_i32_0 : i32, i32
  }
  func.func @transform_2(%arg0: i32) -> (i32, i32) {
    %c0_i32 = arith.constant 0 : i32
    %c0_i32_0 = arith.constant 0 : i32
    %c0_i32_1 = arith.constant 0 : i32
    return %c0_i32, %c0_i32_0 : i32, i32
  }
  func.func @transform_3(%arg0: i32) -> (i32, i32) {
    %c0_i32 = arith.constant 0 : i32
    %c0_i32_0 = arith.constant 0 : i32
    %c0_i32_1 = arith.constant 0 : i32
    return %c0_i32, %c0_i32_0 : i32, i32
  }
  func.func @transform_4(%arg0: i32) -> i32 {
    %c0_i32 = arith.constant 0 : i32
    %c0_i32_0 = arith.constant 0 : i32
    return %c0_i32 : i32
  }
  func.func @transform_5(%arg0: i32) -> (i32, i32) {
    %c0_i32 = arith.constant 0 : i32
    %c0_i32_0 = arith.constant 0 : i32
    return %c0_i32, %arg0 : i32, i32
  }
}

</mosaic_0001>

<llo_original>
// kernel: tpu_custom_call.1
$region0: #{tpu_custom_call.1}
  #allocation0 [shape = 'u32[]', space=smem, size = 0x4, offset = 0x4, fixed_abs, tag = 'smem constant byte address 0x4 - core index']
  #allocation1 [shape = 'u32[144,128]{1,0:T(1,128)}', space=vmem, size = 0x12000, scoped, tag = 'internal scratch']
  #allocation2 [shape = 'f32[1]{0:T(128)S(6)}', space=smem, size = 0x200, scoped, tag = 'scoped memory for tpu_custom_call.1']
  %s0 = inlined_call_operand.vmem [shape: f32[11,128], index: 0, kind: input, shape index: {}]
  %s1 = inlined_call_operand.hbm [shape: f32[8,11], index: 1, kind: input, shape index: {}]
  %s2 = inlined_call_operand.vmem [shape: f32[8,1], index: 2, kind: input, shape index: {}]
  %s3 = inlined_call_operand.vmem [shape: f32[8,1], index: 3, kind: input, shape index: {}]
  %s4 = inlined_call_operand.<no memory space> [shape: f32[1], index: 4, kind: input, shape index: {}]
  %s5 = inlined_call_operand.hbm [shape: f32[1,128], index: 5, kind: output, shape index: {}]
  %s6 = sld [smem:[#allocation0]]
  $region34: #{tpu_custom_call.1} parent=0
    _
  %s8 = ssub.s32 1, %s6
  %s9 = scalar_select 0, %s8, %s6
  %10 = sst [smem:[#allocation2]] %s4
  $region1: #{tpu_custom_call.1} parent=0
    #allocation3 [shape = 'u8[4096]{0}', space=vmem, size = 0x1000, scoped, tag = 'input window, operand 1, single buffered']
    #allocation4 [shape = 's32[1]{0}', space=sflag, size = 0x4, scoped, tag = 'scoped memory for tpu_custom_call.1']
    #allocation5 [shape = 's32[1]{0}', space=sflag, size = 0x4, scoped, tag = 'scoped memory for tpu_custom_call.1']
    #allocation6 [shape = 'u8[512]{0}', space=vmem, size = 0x400, scoped, tag = 'output window, operand 0, single buffered']
    %11 = vsyncpa [#allocation4], 0
    %12 = vsyncpa [#allocation5], 0
    // Predicated region
    $region2: #{tpu_custom_call.1} parent=1 // pred_check
      _
    $region3: #{tpu_custom_call.1} parent=1 // pred_check_branch
      %14 = sbr.rel (0) target = $region5
    $region4: #{tpu_custom_call.1} parent=1 // pred_region
      _
    $region5: #{tpu_custom_call.1} parent=1 // pred_fallthru
      _
    // Predicated region
    $region6: #{tpu_custom_call.1} parent=1 // pred_check
      _
    $region7: #{tpu_custom_call.1} parent=1 // pred_check_branch
      %16 = sbr.rel (0) target = $region9
    $region8: #{tpu_custom_call.1} parent=1 // pred_region
      %s18 = ssub.s32 128, 128
      %19 = vsyncadd [#allocation4], %s18
      %s21 = sshll.u32 [#allocation3], 4
      %s22 = int_to_ptr.vmem [resolvable:$true] %s21
      %24 = dma.hbm_to_vmem [thread:$0]  %s1, 128, %s22, [#allocation4]
    $region9: #{tpu_custom_call.1} parent=1 // pred_fallthru
      _
    // Predicated region
    $region10: #{tpu_custom_call.1} parent=1 // pred_check
      _
    $region11: #{tpu_custom_call.1} parent=1 // pred_check_branch
      %26 = sbr.rel (0) target = $region13
    $region12: #{tpu_custom_call.1} parent=1 // pred_region
      _
    $region13: #{tpu_custom_call.1} parent=1 // pred_fallthru
      _
    // Predicated region
    $region14: #{tpu_custom_call.1} parent=1 // pred_check
      _
    $region15: #{tpu_custom_call.1} parent=1 // pred_check_branch
      %28 = sbr.rel (0) target = $region17
    $region16: #{tpu_custom_call.1} parent=1 // pred_region
      _
    $region17: #{tpu_custom_call.1} parent=1 // pred_fallthru
      _
    // Predicated region
    $region18: #{tpu_custom_call.1} parent=1 // pred_check
      _
    $region19: #{tpu_custom_call.1} parent=1 // pred_check_branch
      %30 = sbr.rel (0) target = $region21
    $region20: #{tpu_custom_call.1} parent=1 // pred_region
      _
    $region21: #{tpu_custom_call.1} parent=1 // pred_fallthru
      _
    // Predicated region
    $region22: #{tpu_custom_call.1} parent=1 // pred_check
      _
    $region23: #{tpu_custom_call.1} parent=1 // pred_check_branch
      %32 = sbr.rel (0) target = $region25
    $region24: #{tpu_custom_call.1} parent=1 // pred_region
      %33 = dma.done [#allocation4], 128
    $region25: #{tpu_custom_call.1} parent=1 // pred_fallthru
      _
    %v34 = vld [vmem:[%s0] sm:$0xff]
    %v35 = vld [vmem:[%s0 + $0x8] sm:$0x7]
    %v36 = vld [vmem:[#allocation3] sm:$0xff]
    %v37 = vld [vmem:[%s2] sm:$0xff]
    %39 = vset.pattern.permute.xlu0 0
    %40 = vperm.xlu0 %39, %v37
    %v41 = vpop.permute.xlu0 %40
    %vm43 = vcmask 89088
    %v45 = vsel %vm43, %v36, 0
    %vm47 = vcmask 1042432
    %v49 = vsel %vm47, %v35, 0
    %51 = vmatprep.subr.mxu0 0.0
    %52 = vmatpush1.msra.mxu0 0.0
    %53 = vmatprep.subr.mxu0 0.0
    %54 = vmatpush1.msra.mxu0 0.0
    %55 = vmatprep.subr.mxu0 0.0
    %56 = vmatpush1.msra.mxu0 0.0
    %57 = vmatprep.subr.mxu0 0.0
    %58 = vmatpush1.msra.mxu0 0.0
    %59 = vmatprep.subr.mxu0 0.0
    %60 = vmatpush1.msra.mxu0 0.0
    %61 = vmatprep.subr.mxu0 0.0
    %62 = vmatpush1.msra.mxu0 0.0
    %63 = vmatprep.subr.mxu0 0.0
    %64 = vmatpush1.msra.mxu0 0.0
    %65 = vmatprep.subr.mxu0 0.0
    %66 = vmatpush1.msra.mxu0 0.0
    %67 = vmatprep.subr.mxu0 0.0
    %68 = vmatpush1.msra.mxu0 0.0
    %69 = vmatprep.subr.mxu0 0.0
    %70 = vmatpush1.msra.mxu0 0.0
    %71 = vmatprep.subr.mxu0 0.0
    %72 = vmatpush1.msra.mxu0 0.0
    %73 = vmatprep.subr.mxu0 0.0
    %74 = vmatpush1.msra.mxu0 0.0
    %75 = vmatprep.subr.mxu0 0.0
    %76 = vmatpush1.msra.mxu0 0.0
    %77 = vmatprep.subr.mxu0 0.0
    %78 = vmatpush1.msra.mxu0 0.0
    %79 = vmatprep.subr.mxu0 0.0
    %80 = vmatpush1.msra.mxu0 %v49
    %81 = vmatprep.subr.mxu0 0.0
    %82 = vmatpush1.msra.mxu0 %v34
    %83 = vmatprep.subr.mxu0 0.0
    %84 = vmatpush2.msra.mxu0 0.0
    %85 = vmatprep.subr.mxu0 0.0
    %86 = vmatpush2.msra.mxu0 0.0
    %87 = vmatprep.subr.mxu0 0.0
    %88 = vmatpush2.msra.mxu0 0.0
    %89 = vmatprep.subr.mxu0 0.0
    %90 = vmatpush2.msra.mxu0 0.0
    %91 = vmatprep.subr.mxu0 0.0
    %92 = vmatpush2.msra.mxu0 0.0
    %93 = vmatprep.subr.mxu0 0.0
    %94 = vmatpush2.msra.mxu0 0.0
    %95 = vmatprep.subr.mxu0 0.0
    %96 = vmatpush2.msra.mxu0 0.0
    %97 = vmatprep.subr.mxu0 0.0
    %98 = vmatpush2.msra.mxu0 0.0
    %99 = vmatprep.subr.mxu0 0.0
    %100 = vmatpush2.msra.mxu0 0.0
    %101 = vmatprep.subr.mxu0 0.0
    %102 = vmatpush2.msra.mxu0 0.0
    %103 = vmatprep.subr.mxu0 0.0
    %104 = vmatpush2.msra.mxu0 0.0
    %105 = vmatprep.subr.mxu0 0.0
    %106 = vmatpush2.msra.mxu0 0.0
    %107 = vmatprep.subr.mxu0 0.0
    %108 = vmatpush2.msra.mxu0 0.0
    %109 = vmatprep.subr.mxu0 0.0
    %110 = vmatpush2.msra.mxu0 0.0
    %111 = vmatprep.subr.mxu0 0.0
    %112 = vmatpush2.msra.mxu0 0.0
    %113 = vmatprep.subr.mxu0 0.0
    %114 = vmatpush2.msra.mxu0 0.0
    %115 = vmatprep.mubr.f32.mxu0 0.0
    %116 = vmatmul.mubr.f32.gmra.mxu0 %v45
    %v117 = vpop.f32.mrf.mxu0
    %v118 = vadd.f32 %v41, %v117
    %v119 = vpop.f32.mrf.mxu0
    %120 = vdwg.mxu0
    %vm121 = vcmp.gt.f32.partialorder %v118, 0.0
    %v122 = vmul.f32 %v118, 0.01
    %v123 = vsel %vm121, %v118, %v122
    %v124 = vld [vmem:[%s3] sm:$0xff]
    %126 = vset.pattern.permute.xlu0 0
    %127 = vperm.xlu0 %126, %v124
    %v128 = vpop.permute.xlu0 %127
    %v130 = vmul.f32 %v128, %v123
    %v131 = vrot.slane %v130, 4
    %v132 = vadd.f32 %v130, %v131
    %v133 = vrot.slane %v132, 2
    %v134 = vadd.f32 %v132, %v133
    %v135 = vrot.slane %v134, 1
    %v136 = vadd.f32 %v134, %v135
    %s137 = sld [smem:[#allocation2]]
    %v138 = vstv %s137
    %v139 = vadd.f32 %v136, %v138
    %v140 = vxor.u32 %v139, 2147483648
    %v141 = vmul.f32 %v140, 1.442695
    %v142 = vpow.pop %v141
    %v143 = vadd.f32 %v142, 1.0
    %v144 = vrcp.pop %v143
    %v145 = vmul.f32 1.0, %v144
    %v146 = vmul.f32 %v145, 0.95
    %147 = vst [vmem:[#allocation6] sm:$0x1] %v146
    // Predicated region
    $region26: #{tpu_custom_call.1} parent=1 // pred_check
      _
    $region27: #{tpu_custom_call.1} parent=1 // pred_check_branch
      %149 = sbr.rel (0) target = $region29
    $region28: #{tpu_custom_call.1} parent=1 // pred_region
      %s151 = ssub.s32 16, 16
      %152 = vsyncadd [#allocation5], %s151
      %s154 = sshll.u32 [#allocation6], 4
      %s155 = int_to_ptr.vmem [resolvable:$true] %s154
      %157 = dma.vmem_to_hbm [thread:$0]  %s155, 16, %s5, [#allocation5]
    $region29: #{tpu_custom_call.1} parent=1 // pred_fallthru
      _
    // Predicated region
    $region30: #{tpu_custom_call.1} parent=1 // pred_check
      _
    $region31: #{tpu_custom_call.1} parent=1 // pred_check_branch
      %159 = sbr.rel (0) target = $region33
    $region32: #{tpu_custom_call.1} parent=1 // pred_region
      %160 = dma.done [#allocation5], 16
    $region33: #{tpu_custom_call.1} parent=1 // pred_fallthru
      _
    %161 = vsyncpa [#allocation4], 1
    %162 = vsyncpa [#allocation5], 1

</llo_original>
